<compile_context>
chip_gen: v6e
topology: v6e:2x2x1
jax: 0.10.0
libtpu: 0.0.40
codegen_flags: <defaults>
</compile_context>

<pallas_src>
import functools

import jax
import jax.numpy as jnp
from jax.experimental import pallas as pl
from jax.experimental.pallas import tpu as pltpu


def _double_conv_kernel(x_ref, masks_ref, w1_ref, b1_ref, w2_ref, b2_ref,
                        o_ref, p1_ref, p2_ref, pad_ref, *, height, width, nb):
    # x_ref    : (Nb, Cin, FLp)  bf16, FLp = round_up((H+2)*W + 2, 128);
    #                            H-zero-padded, row-major flattened, one extra
    #                            zero in front, alignment zeros at the back.
    # masks_ref: (2, H*W)        bf16, row0 = "not leftmost col", row1 = "not rightmost col"
    # w1_ref   : (Cout, 9*Cin)   bf16, columns ordered (dy, dx, ci)
    # b1_ref   : (Cout, 1)       f32
    # w2_ref   : (Cout, 9*Cout)  bf16
    # b2_ref   : (Cout, 1)       f32
    # o_ref    : (Nb, Cout, H*W)
    # p1_ref   : (9*Cin,  Nb*H*W) bf16 scratch (im2col patches, conv1)
    # p2_ref   : (9*Cout, Nb*H*W) bf16 scratch (im2col patches, conv2)
    # pad_ref  : (Nb, Cout, FLp)  bf16 scratch (re-padded conv1 output)
    H, W = height, width
    HW = H * W
    FL = (H + 2) * W + 2          # logical flattened extent actually read
    cin = x_ref.shape[1]
    cout = o_ref.shape[1]

    mask_l = masks_ref[0:1, :]    # 0 where w == 0     (kills wrap from w-1 < 0)
    mask_r = masks_ref[1:2, :]    # 0 where w == W-1   (kills wrap from w+1 >= W)

    def im2col_matmul_relu(slab_of, w_ref, b_ref, p_ref, nch):
        # Each 3x3 tap (dy, dx) of the H-padded image is a contiguous lane-axis
        # slice starting at dy*W + dx; left/right column wrap-around is masked.
        # All 9 taps of all Nb images are packed into the bf16 im2col scratch
        # and contracted in ONE MXU matmul; bias + ReLU in f32.
        for b in range(nb):
            for dy in range(3):
                for dx in range(3):
                    tap = dy * 3 + dx
                    start = dy * W + dx
                    slab = slab_of(b, start)                 # (nch, HW) bf16
                    if dx == 0:
                        slab = slab * mask_l
                    elif dx == 2:
                        slab = slab * mask_r
                    p_ref[tap * nch:(tap + 1) * nch, b * HW:(b + 1) * HW] = slab
        acc = jnp.dot(w_ref[...], p_ref[...], preferred_element_type=jnp.float32)
        return jnp.maximum(acc + b_ref[...], 0.0)            # (cout, Nb*HW) f32

    # ---- conv1 + ReLU : (Cin, FLp) -> (Cout, Nb*HW) -------------------------
    y1 = im2col_matmul_relu(lambda b, s: x_ref[b, :, s:s + HW],
                            w1_ref, b1_ref, p1_ref, cin)

    # Re-pad conv1 output into the flattened H-padded bf16 layout for conv2.
    # Only the two halo slices are zeroed (every step; the interior is fully
    # overwritten, and nothing past FL is ever read).
    for b in range(nb):
        pad_ref[b, :, 0:W + 1] = jnp.zeros((cout, W + 1), jnp.bfloat16)
        pad_ref[b, :, W + 1 + HW:FL] = jnp.zeros((cout, W + 1), jnp.bfloat16)
        pad_ref[b, :, W + 1:W + 1 + HW] = y1[:, b * HW:(b + 1) * HW].astype(jnp.bfloat16)

    # ---- conv2 + ReLU : (Cout, FLp) -> (Cout, Nb*HW), stored lane-dense -----
    y2 = im2col_matmul_relu(lambda b, s: pad_ref[b, :, s:s + HW],
                            w2_ref, b2_ref, p2_ref, cout)
    for b in range(nb):
        o_ref[b] = y2[:, b * HW:(b + 1) * HW].astype(o_ref.dtype)


def double_conv_forward(x_nchw, w1_oihw, b1, w2_oihw, b2, *, images_per_step=None):
    """x_nchw: (N, Cin, H, W) f32. Weights in PyTorch OIHW layout."""
    N, Cin, H, W = x_nchw.shape
    Cout = w1_oihw.shape[0]
    HW = H * W
    FLp = pl.cdiv((H + 2) * W + 2, 128) * 128   # lane-aligned flattened extent

    # Images folded into the lane axis per grid step; keep >= 2 grid steps when
    # possible so both v7x TensorCores get work (v5e/v6e: only pipeline overlap).
    if images_per_step is None:
        nb = 1
        for d in range(N, 0, -1):
            if N % d == 0 and (N // d >= 2 or d == 1):
                nb = d
                break
    else:
        nb = images_per_step
    assert N % nb == 0, (N, nb)

    # ---- layout plumbing (pads/reshapes/casts only, no image transposes) ----
    x_hp = jnp.pad(x_nchw, ((0, 0), (0, 0), (1, 1), (0, 0)))          # pad H only
    x_flat = x_hp.reshape(N, Cin, (H + 2) * W)
    x_flat = jnp.pad(x_flat, ((0, 0), (0, 0), (1, FLp - (H + 2) * W - 1)))
    x_flat = x_flat.astype(jnp.bfloat16)                              # bf16 DMA

    col = jnp.arange(HW, dtype=jnp.int32) % W
    masks = jnp.stack([col != 0, col != W - 1]).astype(jnp.bfloat16)  # (2, HW)

    # OIHW -> (Cout, 9*C) with columns ordered (dy, dx, ci); bf16 MXU operands.
    w1r = jnp.transpose(w1_oihw, (0, 2, 3, 1)).reshape(Cout, 9 * Cin).astype(jnp.bfloat16)
    w2r = jnp.transpose(w2_oihw, (0, 2, 3, 1)).reshape(Cout, 9 * Cout).astype(jnp.bfloat16)
    b1c = b1.reshape(Cout, 1).astype(jnp.float32)
    b2c = b2.reshape(Cout, 1).astype(jnp.float32)

    kernel = functools.partial(_double_conv_kernel, height=H, width=W, nb=nb)

    flops = 2 * N * HW * 9 * (Cin * Cout + Cout * Cout)
    bytes_accessed = (N * Cin * FLp * 2 + 2 * HW * 2
                      + Cout * 9 * Cin * 2 + Cout * 9 * Cout * 2 + 2 * Cout * 4
                      + N * Cout * HW * 4)

    out_flat = pl.pallas_call(
        kernel,
        out_shape=jax.ShapeDtypeStruct((N, Cout, HW), x_nchw.dtype),
        grid_spec=pltpu.PrefetchScalarGridSpec(
            num_scalar_prefetch=0,
            grid=(N // nb,),
            in_specs=[
                pl.BlockSpec((nb, Cin, FLp), lambda n: (n, 0, 0)),
                pl.BlockSpec((2, HW), lambda n: (0, 0)),
                pl.BlockSpec((Cout, 9 * Cin), lambda n: (0, 0)),
                pl.BlockSpec((Cout, 1), lambda n: (0, 0)),
                pl.BlockSpec((Cout, 9 * Cout), lambda n: (0, 0)),
                pl.BlockSpec((Cout, 1), lambda n: (0, 0)),
            ],
            out_specs=pl.BlockSpec((nb, Cout, HW), lambda n: (n, 0, 0)),
            scratch_shapes=[
                pltpu.VMEM((9 * Cin, nb * HW), jnp.bfloat16),   # conv1 im2col
                pltpu.VMEM((9 * Cout, nb * HW), jnp.bfloat16),  # conv2 im2col
                pltpu.VMEM((nb, Cout, FLp), jnp.bfloat16),      # re-padded y1
            ],
        ),
        compiler_params=pltpu.CompilerParams(
            dimension_semantics=("parallel",),
            vmem_limit_bytes=40 * 1024 * 1024,
        ),
        cost_estimate=pl.CostEstimate(flops=flops, transcendentals=0,
                                      bytes_accessed=bytes_accessed),
    )(x_flat, masks, w1r, b1c, w2r, b2c)

    return out_flat.reshape(N, Cout, H, W)   # free reshape back to NCHW


def _reference(x, w1, b1, w2, b2):
    """Pure-JAX f32 reference matching PyTorch DoubleConv semantics."""
    dn1 = jax.lax.conv_dimension_numbers(x.shape, w1.shape, ("NCHW", "OIHW", "NCHW"))
    y = jax.lax.conv_general_dilated(x, w1, (1, 1), "SAME", dimension_numbers=dn1)
    y = jnp.maximum(y + b1[None, :, None, None], 0.0)
    dn2 = jax.lax.conv_dimension_numbers(y.shape, w2.shape, ("NCHW", "OIHW", "NCHW"))
    z = jax.lax.conv_general_dilated(y, w2, (1, 1), "SAME", dimension_numbers=dn2)
    return jnp.maximum(z + b2[None, :, None, None], 0.0)


if __name__ == "__main__":
    N, Cin, Cout, H, W = 2, 4, 8, 16, 16
    key = jax.random.PRNGKey(0)
    kx, k1, kb1, k2, kb2 = jax.random.split(key, 5)

    x = jax.random.normal(kx, (N, Cin, H, W), jnp.float32)
    bound1 = 1.0 / (Cin * 9) ** 0.5
    w1 = jax.random.uniform(k1, (Cout, Cin, 3, 3), jnp.float32, -bound1, bound1)
    b1 = jax.random.uniform(kb1, (Cout,), jnp.float32, -bound1, bound1)
    bound2 = 1.0 / (Cout * 9) ** 0.5
    w2 = jax.random.uniform(k2, (Cout, Cout, 3, 3), jnp.float32, -bound2, bound2)
    b2 = jax.random.uniform(kb2, (Cout,), jnp.float32, -bound2, bound2)

    out = jax.block_until_ready(double_conv_forward(x, w1, b1, w2, b2))
    ref = jax.block_until_ready(_reference(x, w1, b1, w2, b2))

    assert out.shape == (N, Cout, H, W), out.shape
    err = float(jnp.max(jnp.abs(out - ref)))
    # bf16 MXU operands / bf16 activations with f32 accumulation -> bf16-level error.
    assert err < 5e-2, err
    print("KERNEL_OK")
</pallas_src>

<mosaic_0001>
module attributes {stable_mosaic.version = 11 : i64} {
  func.func @_double_conv_kernel(%arg0: i32, %arg1: memref<1x4x384xbf16, #tpu.memory_space<vmem>>, %arg2: memref<2x256xbf16, #tpu.memory_space<vmem>>, %arg3: memref<8x36xbf16, #tpu.memory_space<vmem>>, %arg4: memref<8x1xf32, #tpu.memory_space<vmem>>, %arg5: memref<8x72xbf16, #tpu.memory_space<vmem>>, %arg6: memref<8x1xf32, #tpu.memory_space<vmem>>, %arg7: memref<1x8x256xf32, #tpu.memory_space<vmem>>, %arg8: memref<36x256xbf16, #tpu.memory_space<vmem>>, %arg9: memref<72x256xbf16, #tpu.memory_space<vmem>>, %arg10: memref<1x8x384xbf16, #tpu.memory_space<vmem>>) attributes {dimension_semantics = [#tpu.dimension_semantics<parallel>], iteration_bounds = array<i64: 2>, scalar_prefetch = 0 : i64, scratch_operands = 3 : i64, tpu.core_type = #tpu.core_type<tc>, window_params = [{transform_indices = @transform_0, window_bounds = array<i64: 1, 4, 384>}, {pipeline_mode = #tpu.pipeline_mode<synchronous>, transform_indices = @transform_1, window_bounds = array<i64: 2, 256>}, {pipeline_mode = #tpu.pipeline_mode<synchronous>, transform_indices = @transform_2, window_bounds = array<i64: 8, 36>}, {pipeline_mode = #tpu.pipeline_mode<synchronous>, transform_indices = @transform_3, window_bounds = array<i64: 8, 1>}, {pipeline_mode = #tpu.pipeline_mode<synchronous>, transform_indices = @transform_4, window_bounds = array<i64: 8, 72>}, {pipeline_mode = #tpu.pipeline_mode<synchronous>, transform_indices = @transform_5, window_bounds = array<i64: 8, 1>}, {transform_indices = @transform_6, window_bounds = array<i64: 1, 8, 256>}]} {
    %c0 = arith.constant 0 : index
    %c0_0 = arith.constant 0 : index
    %0 = vector.load %arg2[%c0, %c0_0] : memref<2x256xbf16, #tpu.memory_space<vmem>>, vector<1x256xbf16>
    %c1 = arith.constant 1 : index
    %c0_1 = arith.constant 0 : index
    %1 = vector.load %arg2[%c1, %c0_1] : memref<2x256xbf16, #tpu.memory_space<vmem>>, vector<1x256xbf16>
    %c0_2 = arith.constant 0 : index
    %c0_3 = arith.constant 0 : index
    %c0_4 = arith.constant 0 : index
    %2 = vector.load %arg1[%c0_2, %c0_3, %c0_4] : memref<1x4x384xbf16, #tpu.memory_space<vmem>>, vector<1x4x256xbf16>
    %3 = vector.shape_cast %2 : vector<1x4x256xbf16> to vector<4x256xbf16>
    %4 = vector.broadcast %0 : vector<1x256xbf16> to vector<4x256xbf16>
    %5 = arith.mulf %3, %4 : vector<4x256xbf16>
    %c0_5 = arith.constant 0 : index
    %c0_6 = arith.constant 0 : index
    %6 = vector.load %arg8[%c0_5, %c0_6] : memref<36x256xbf16, #tpu.memory_space<vmem>>, vector<4x256xbf16>
    tpu.vector_store %arg8[%c0_5, %c0_6], %5 {strides = array<i32>} : memref<36x256xbf16, #tpu.memory_space<vmem>>, vector<4x256xbf16>,
    %c0_7 = arith.constant 0 : index
    %c0_8 = arith.constant 0 : index
    %c1_9 = arith.constant 1 : index
    %7 = vector.load %arg1[%c0_7, %c0_8, %c1_9] : memref<1x4x384xbf16, #tpu.memory_space<vmem>>, vector<1x4x256xbf16>
    %8 = vector.shape_cast %7 : vector<1x4x256xbf16> to vector<4x256xbf16>
    %c4 = arith.constant 4 : index
    %c0_10 = arith.constant 0 : index
    %9 = vector.load %arg8[%c4, %c0_10] : memref<36x256xbf16, #tpu.memory_space<vmem>>, vector<4x256xbf16>
    tpu.vector_store %arg8[%c4, %c0_10], %8 {strides = array<i32>} : memref<36x256xbf16, #tpu.memory_space<vmem>>, vector<4x256xbf16>,
    %c0_11 = arith.constant 0 : index
    %c0_12 = arith.constant 0 : index
    %c2 = arith.constant 2 : index
    %10 = vector.load %arg1[%c0_11, %c0_12, %c2] : memref<1x4x384xbf16, #tpu.memory_space<vmem>>, vector<1x4x256xbf16>
    %11 = vector.shape_cast %10 : vector<1x4x256xbf16> to vector<4x256xbf16>
    %12 = vector.broadcast %1 : vector<1x256xbf16> to vector<4x256xbf16>
    %13 = arith.mulf %11, %12 : vector<4x256xbf16>
    %c8 = arith.constant 8 : index
    %c0_13 = arith.constant 0 : index
    %14 = vector.load %arg8[%c8, %c0_13] : memref<36x256xbf16, #tpu.memory_space<vmem>>, vector<4x256xbf16>
    tpu.vector_store %arg8[%c8, %c0_13], %13 {strides = array<i32>} : memref<36x256xbf16, #tpu.memory_space<vmem>>, vector<4x256xbf16>,
    %c0_14 = arith.constant 0 : index
    %c0_15 = arith.constant 0 : index
    %c16 = arith.constant 16 : index
    %15 = vector.load %arg1[%c0_14, %c0_15, %c16] : memref<1x4x384xbf16, #tpu.memory_space<vmem>>, vector<1x4x256xbf16>
    %16 = vector.shape_cast %15 : vector<1x4x256xbf16> to vector<4x256xbf16>
    %17 = vector.broadcast %0 : vector<1x256xbf16> to vector<4x256xbf16>
    %18 = arith.mulf %16, %17 : vector<4x256xbf16>
    %c12 = arith.constant 12 : index
    %c0_16 = arith.constant 0 : index
    %19 = vector.load %arg8[%c12, %c0_16] : memref<36x256xbf16, #tpu.memory_space<vmem>>, vector<4x256xbf16>
    tpu.vector_store %arg8[%c12, %c0_16], %18 {strides = array<i32>} : memref<36x256xbf16, #tpu.memory_space<vmem>>, vector<4x256xbf16>,
    %c0_17 = arith.constant 0 : index
    %c0_18 = arith.constant 0 : index
    %c17 = arith.constant 17 : index
    %20 = vector.load %arg1[%c0_17, %c0_18, %c17] : memref<1x4x384xbf16, #tpu.memory_space<vmem>>, vector<1x4x256xbf16>
    %21 = vector.shape_cast %20 : vector<1x4x256xbf16> to vector<4x256xbf16>
    %c16_19 = arith.constant 16 : index
    %c0_20 = arith.constant 0 : index
    %22 = vector.load %arg8[%c16_19, %c0_20] : memref<36x256xbf16, #tpu.memory_space<vmem>>, vector<4x256xbf16>
    tpu.vector_store %arg8[%c16_19, %c0_20], %21 {strides = array<i32>} : memref<36x256xbf16, #tpu.memory_space<vmem>>, vector<4x256xbf16>,
    %c0_21 = arith.constant 0 : index
    %c0_22 = arith.constant 0 : index
    %c18 = arith.constant 18 : index
    %23 = vector.load %arg1[%c0_21, %c0_22, %c18] : memref<1x4x384xbf16, #tpu.memory_space<vmem>>, vector<1x4x256xbf16>
    %24 = vector.shape_cast %23 : vector<1x4x256xbf16> to vector<4x256xbf16>
    %25 = vector.broadcast %1 : vector<1x256xbf16> to vector<4x256xbf16>
    %26 = arith.mulf %24, %25 : vector<4x256xbf16>
    %c20 = arith.constant 20 : index
    %c0_23 = arith.constant 0 : index
    %27 = vector.load %arg8[%c20, %c0_23] : memref<36x256xbf16, #tpu.memory_space<vmem>>, vector<4x256xbf16>
    tpu.vector_store %arg8[%c20, %c0_23], %26 {strides = array<i32>} : memref<36x256xbf16, #tpu.memory_space<vmem>>, vector<4x256xbf16>,
    %c0_24 = arith.constant 0 : index
    %c0_25 = arith.constant 0 : index
    %c32 = arith.constant 32 : index
    %28 = vector.load %arg1[%c0_24, %c0_25, %c32] : memref<1x4x384xbf16, #tpu.memory_space<vmem>>, vector<1x4x256xbf16>
    %29 = vector.shape_cast %28 : vector<1x4x256xbf16> to vector<4x256xbf16>
    %30 = vector.broadcast %0 : vector<1x256xbf16> to vector<4x256xbf16>
    %31 = arith.mulf %29, %30 : vector<4x256xbf16>
    %c24 = arith.constant 24 : index
    %c0_26 = arith.constant 0 : index
    %32 = vector.load %arg8[%c24, %c0_26] : memref<36x256xbf16, #tpu.memory_space<vmem>>, vector<4x256xbf16>
    tpu.vector_store %arg8[%c24, %c0_26], %31 {strides = array<i32>} : memref<36x256xbf16, #tpu.memory_space<vmem>>, vector<4x256xbf16>,
    %c0_27 = arith.constant 0 : index
    %c0_28 = arith.constant 0 : index
    %c33 = arith.constant 33 : index
    %33 = vector.load %arg1[%c0_27, %c0_28, %c33] : memref<1x4x384xbf16, #tpu.memory_space<vmem>>, vector<1x4x256xbf16>
    %34 = vector.shape_cast %33 : vector<1x4x256xbf16> to vector<4x256xbf16>
    %c28 = arith.constant 28 : index
    %c0_29 = arith.constant 0 : index
    %35 = vector.load %arg8[%c28, %c0_29] : memref<36x256xbf16, #tpu.memory_space<vmem>>, vector<4x256xbf16>
    tpu.vector_store %arg8[%c28, %c0_29], %34 {strides = array<i32>} : memref<36x256xbf16, #tpu.memory_space<vmem>>, vector<4x256xbf16>,
    %c0_30 = arith.constant 0 : index
    %c0_31 = arith.constant 0 : index
    %c34 = arith.constant 34 : index
    %36 = vector.load %arg1[%c0_30, %c0_31, %c34] : memref<1x4x384xbf16, #tpu.memory_space<vmem>>, vector<1x4x256xbf16>
    %37 = vector.shape_cast %36 : vector<1x4x256xbf16> to vector<4x256xbf16>
    %38 = vector.broadcast %1 : vector<1x256xbf16> to vector<4x256xbf16>
    %39 = arith.mulf %37, %38 : vector<4x256xbf16>
    %c32_32 = arith.constant 32 : index
    %c0_33 = arith.constant 0 : index
    %40 = vector.load %arg8[%c32_32, %c0_33] : memref<36x256xbf16, #tpu.memory_space<vmem>>, vector<4x256xbf16>
    tpu.vector_store %arg8[%c32_32, %c0_33], %39 {strides = array<i32>} : memref<36x256xbf16, #tpu.memory_space<vmem>>, vector<4x256xbf16>,
    %c0_34 = arith.constant 0 : index
    %c0_35 = arith.constant 0 : index
    %41 = vector.load %arg3[%c0_34, %c0_35] : memref<8x36xbf16, #tpu.memory_space<vmem>>, vector<8x36xbf16>
    %c0_36 = arith.constant 0 : index
    %c0_37 = arith.constant 0 : index
    %42 = vector.load %arg8[%c0_36, %c0_37] : memref<36x256xbf16, #tpu.memory_space<vmem>>, vector<36x256xbf16>
    %cst = arith.constant dense<0.000000e+00> : vector<8x256xf32>
    %43 = tpu.matmul %41, %42, %cst {dimension_numbers = #tpu.dot_dimension_numbers<[1], [0], [0], [1], [0, 0, 1, 1], [], []>} : vector<8x36xbf16>, vector<36x256xbf16>, vector<8x256xf32> -> vector<8x256xf32>
    %c0_38 = arith.constant 0 : index
    %c0_39 = arith.constant 0 : index
    %44 = vector.load %arg4[%c0_38, %c0_39] : memref<8x1xf32, #tpu.memory_space<vmem>>, vector<8x1xf32>
    %45 = vector.broadcast %44 : vector<8x1xf32> to vector<8x256xf32>
    %46 = arith.addf %43, %45 : vector<8x256xf32>
    %cst_40 = arith.constant 0.000000e+00 : f32
    %47 = vector.broadcast %cst_40 : f32 to vector<8x256xf32>
    %48 = arith.maximumf %46, %47 : vector<8x256xf32>
    %cst_41 = arith.constant 0.000000e+00 : bf16
    %49 = vector.broadcast %cst_41 : bf16 to vector<8x17xbf16>
    %c0_42 = arith.constant 0 : index
    %c0_43 = arith.constant 0 : index
    %c0_44 = arith.constant 0 : index
    %50 = vector.load %arg10[%c0_42, %c0_43, %c0_44] : memref<1x8x384xbf16, #tpu.memory_space<vmem>>, vector<1x8x17xbf16>
    %51 = vector.shape_cast %50 : vector<1x8x17xbf16> to vector<8x17xbf16>
    %52 = vector.shape_cast %49 : vector<8x17xbf16> to vector<1x8x17xbf16>
    tpu.vector_store %arg10[%c0_42, %c0_43, %c0_44], %52 {strides = array<i32>} : memref<1x8x384xbf16, #tpu.memory_space<vmem>>, vector<1x8x17xbf16>,
    %cst_45 = arith.constant 0.000000e+00 : bf16
    %53 = vector.broadcast %cst_45 : bf16 to vector<8x17xbf16>
    %c0_46 = arith.constant 0 : index
    %c0_47 = arith.constant 0 : index
    %c273 = arith.constant 273 : index
    %54 = vector.load %arg10[%c0_46, %c0_47, %c273] : memref<1x8x384xbf16, #tpu.memory_space<vmem>>, vector<1x8x17xbf16>
    %55 = vector.shape_cast %54 : vector<1x8x17xbf16> to vector<8x17xbf16>
    %56 = vector.shape_cast %53 : vector<8x17xbf16> to vector<1x8x17xbf16>
    tpu.vector_store %arg10[%c0_46, %c0_47, %c273], %56 {strides = array<i32>} : memref<1x8x384xbf16, #tpu.memory_space<vmem>>, vector<1x8x17xbf16>,
    %57 = arith.truncf %48 : vector<8x256xf32> to vector<8x256xbf16>
    %c0_48 = arith.constant 0 : index
    %c0_49 = arith.constant 0 : index
    %c17_50 = arith.constant 17 : index
    %58 = vector.load %arg10[%c0_48, %c0_49, %c17_50] : memref<1x8x384xbf16, #tpu.memory_space<vmem>>, vector<1x8x256xbf16>
    %59 = vector.shape_cast %58 : vector<1x8x256xbf16> to vector<8x256xbf16>
    %60 = vector.shape_cast %57 : vector<8x256xbf16> to vector<1x8x256xbf16>
    tpu.vector_store %arg10[%c0_48, %c0_49, %c17_50], %60 {strides = array<i32>} : memref<1x8x384xbf16, #tpu.memory_space<vmem>>, vector<1x8x256xbf16>,
    %c0_51 = arith.constant 0 : index
    %c0_52 = arith.constant 0 : index
    %c0_53 = arith.constant 0 : index
    %61 = vector.load %arg10[%c0_51, %c0_52, %c0_53] : memref<1x8x384xbf16, #tpu.memory_space<vmem>>, vector<1x8x256xbf16>
    %62 = vector.shape_cast %61 : vector<1x8x256xbf16> to vector<8x256xbf16>
    %63 = vector.broadcast %0 : vector<1x256xbf16> to vector<8x256xbf16>
    %64 = arith.mulf %62, %63 : vector<8x256xbf16>
    %c0_54 = arith.constant 0 : index
    %c0_55 = arith.constant 0 : index
    %65 = vector.load %arg9[%c0_54, %c0_55] : memref<72x256xbf16, #tpu.memory_space<vmem>>, vector<8x256xbf16>
    tpu.vector_store %arg9[%c0_54, %c0_55], %64 {strides = array<i32>} : memref<72x256xbf16, #tpu.memory_space<vmem>>, vector<8x256xbf16>,
    %c0_56 = arith.constant 0 : index
    %c0_57 = arith.constant 0 : index
    %c1_58 = arith.constant 1 : index
    %66 = vector.load %arg10[%c0_56, %c0_57, %c1_58] : memref<1x8x384xbf16, #tpu.memory_space<vmem>>, vector<1x8x256xbf16>
    %67 = vector.shape_cast %66 : vector<1x8x256xbf16> to vector<8x256xbf16>
    %c8_59 = arith.constant 8 : index
    %c0_60 = arith.constant 0 : index
    %68 = vector.load %arg9[%c8_59, %c0_60] : memref<72x256xbf16, #tpu.memory_space<vmem>>, vector<8x256xbf16>
    tpu.vector_store %arg9[%c8_59, %c0_60], %67 {strides = array<i32>} : memref<72x256xbf16, #tpu.memory_space<vmem>>, vector<8x256xbf16>,
    %c0_61 = arith.constant 0 : index
    %c0_62 = arith.constant 0 : index
    %c2_63 = arith.constant 2 : index
    %69 = vector.load %arg10[%c0_61, %c0_62, %c2_63] : memref<1x8x384xbf16, #tpu.memory_space<vmem>>, vector<1x8x256xbf16>
    %70 = vector.shape_cast %69 : vector<1x8x256xbf16> to vector<8x256xbf16>
    %71 = vector.broadcast %1 : vector<1x256xbf16> to vector<8x256xbf16>
    %72 = arith.mulf %70, %71 : vector<8x256xbf16>
    %c16_64 = arith.constant 16 : index
    %c0_65 = arith.constant 0 : index
    %73 = vector.load %arg9[%c16_64, %c0_65] : memref<72x256xbf16, #tpu.memory_space<vmem>>, vector<8x256xbf16>
    tpu.vector_store %arg9[%c16_64, %c0_65], %72 {strides = array<i32>} : memref<72x256xbf16, #tpu.memory_space<vmem>>, vector<8x256xbf16>,
    %c0_66 = arith.constant 0 : index
    %c0_67 = arith.constant 0 : index
    %c16_68 = arith.constant 16 : index
    %74 = vector.load %arg10[%c0_66, %c0_67, %c16_68] : memref<1x8x384xbf16, #tpu.memory_space<vmem>>, vector<1x8x256xbf16>
    %75 = vector.shape_cast %74 : vector<1x8x256xbf16> to vector<8x256xbf16>
    %76 = vector.broadcast %0 : vector<1x256xbf16> to vector<8x256xbf16>
    %77 = arith.mulf %75, %76 : vector<8x256xbf16>
    %c24_69 = arith.constant 24 : index
    %c0_70 = arith.constant 0 : index
    %78 = vector.load %arg9[%c24_69, %c0_70] : memref<72x256xbf16, #tpu.memory_space<vmem>>, vector<8x256xbf16>
    tpu.vector_store %arg9[%c24_69, %c0_70], %77 {strides = array<i32>} : memref<72x256xbf16, #tpu.memory_space<vmem>>, vector<8x256xbf16>,
    %c0_71 = arith.constant 0 : index
    %c0_72 = arith.constant 0 : index
    %c17_73 = arith.constant 17 : index
    %79 = vector.load %arg10[%c0_71, %c0_72, %c17_73] : memref<1x8x384xbf16, #tpu.memory_space<vmem>>, vector<1x8x256xbf16>
    %80 = vector.shape_cast %79 : vector<1x8x256xbf16> to vector<8x256xbf16>
    %c32_74 = arith.constant 32 : index
    %c0_75 = arith.constant 0 : index
    %81 = vector.load %arg9[%c32_74, %c0_75] : memref<72x256xbf16, #tpu.memory_space<vmem>>, vector<8x256xbf16>
    tpu.vector_store %arg9[%c32_74, %c0_75], %80 {strides = array<i32>} : memref<72x256xbf16, #tpu.memory_space<vmem>>, vector<8x256xbf16>,
    %c0_76 = arith.constant 0 : index
    %c0_77 = arith.constant 0 : index
    %c18_78 = arith.constant 18 : index
    %82 = vector.load %arg10[%c0_76, %c0_77, %c18_78] : memref<1x8x384xbf16, #tpu.memory_space<vmem>>, vector<1x8x256xbf16>
    %83 = vector.shape_cast %82 : vector<1x8x256xbf16> to vector<8x256xbf16>
    %84 = vector.broadcast %1 : vector<1x256xbf16> to vector<8x256xbf16>
    %85 = arith.mulf %83, %84 : vector<8x256xbf16>
    %c40 = arith.constant 40 : index
    %c0_79 = arith.constant 0 : index
    %86 = vector.load %arg9[%c40, %c0_79] : memref<72x256xbf16, #tpu.memory_space<vmem>>, vector<8x256xbf16>
    tpu.vector_store %arg9[%c40, %c0_79], %85 {strides = array<i32>} : memref<72x256xbf16, #tpu.memory_space<vmem>>, vector<8x256xbf16>,
    %c0_80 = arith.constant 0 : index
    %c0_81 = arith.constant 0 : index
    %c32_82 = arith.constant 32 : index
    %87 = vector.load %arg10[%c0_80, %c0_81, %c32_82] : memref<1x8x384xbf16, #tpu.memory_space<vmem>>, vector<1x8x256xbf16>
    %88 = vector.shape_cast %87 : vector<1x8x256xbf16> to vector<8x256xbf16>
    %89 = vector.broadcast %0 : vector<1x256xbf16> to vector<8x256xbf16>
    %90 = arith.mulf %88, %89 : vector<8x256xbf16>
    %c48 = arith.constant 48 : index
    %c0_83 = arith.constant 0 : index
    %91 = vector.load %arg9[%c48, %c0_83] : memref<72x256xbf16, #tpu.memory_space<vmem>>, vector<8x256xbf16>
    tpu.vector_store %arg9[%c48, %c0_83], %90 {strides = array<i32>} : memref<72x256xbf16, #tpu.memory_space<vmem>>, vector<8x256xbf16>,
    %c0_84 = arith.constant 0 : index
    %c0_85 = arith.constant 0 : index
    %c33_86 = arith.constant 33 : index
    %92 = vector.load %arg10[%c0_84, %c0_85, %c33_86] : memref<1x8x384xbf16, #tpu.memory_space<vmem>>, vector<1x8x256xbf16>
    %93 = vector.shape_cast %92 : vector<1x8x256xbf16> to vector<8x256xbf16>
    %c56 = arith.constant 56 : index
    %c0_87 = arith.constant 0 : index
    %94 = vector.load %arg9[%c56, %c0_87] : memref<72x256xbf16, #tpu.memory_space<vmem>>, vector<8x256xbf16>
    tpu.vector_store %arg9[%c56, %c0_87], %93 {strides = array<i32>} : memref<72x256xbf16, #tpu.memory_space<vmem>>, vector<8x256xbf16>,
    %c0_88 = arith.constant 0 : index
    %c0_89 = arith.constant 0 : index
    %c34_90 = arith.constant 34 : index
    %95 = vector.load %arg10[%c0_88, %c0_89, %c34_90] : memref<1x8x384xbf16, #tpu.memory_space<vmem>>, vector<1x8x256xbf16>
    %96 = vector.shape_cast %95 : vector<1x8x256xbf16> to vector<8x256xbf16>
    %97 = vector.broadcast %1 : vector<1x256xbf16> to vector<8x256xbf16>
    %98 = arith.mulf %96, %97 : vector<8x256xbf16>
    %c64 = arith.constant 64 : index
    %c0_91 = arith.constant 0 : index
    %99 = vector.load %arg9[%c64, %c0_91] : memref<72x256xbf16, #tpu.memory_space<vmem>>, vector<8x256xbf16>
    tpu.vector_store %arg9[%c64, %c0_91], %98 {strides = array<i32>} : memref<72x256xbf16, #tpu.memory_space<vmem>>, vector<8x256xbf16>,
    %c0_92 = arith.constant 0 : index
    %c0_93 = arith.constant 0 : index
    %100 = vector.load %arg5[%c0_92, %c0_93] : memref<8x72xbf16, #tpu.memory_space<vmem>>, vector<8x72xbf16>
    %c0_94 = arith.constant 0 : index
    %c0_95 = arith.constant 0 : index
    %101 = vector.load %arg9[%c0_94, %c0_95] : memref<72x256xbf16, #tpu.memory_space<vmem>>, vector<72x256xbf16>
    %cst_96 = arith.constant dense<0.000000e+00> : vector<8x256xf32>
    %102 = tpu.matmul %100, %101, %cst_96 {dimension_numbers = #tpu.dot_dimension_numbers<[1], [0], [0], [1], [0, 0, 1, 1], [], []>} : vector<8x72xbf16>, vector<72x256xbf16>, vector<8x256xf32> -> vector<8x256xf32>
    %c0_97 = arith.constant 0 : index
    %c0_98 = arith.constant 0 : index
    %103 = vector.load %arg6[%c0_97, %c0_98] : memref<8x1xf32, #tpu.memory_space<vmem>>, vector<8x1xf32>
    %104 = vector.broadcast %103 : vector<8x1xf32> to vector<8x256xf32>
    %105 = arith.addf %102, %104 : vector<8x256xf32>
    %cst_99 = arith.constant 0.000000e+00 : f32
    %106 = vector.broadcast %cst_99 : f32 to vector<8x256xf32>
    %107 = arith.maximumf %105, %106 : vector<8x256xf32>
    %c0_100 = arith.constant 0 : index
    %c0_101 = arith.constant 0 : index
    %c0_102 = arith.constant 0 : index
    %108 = vector.load %arg7[%c0_100, %c0_101, %c0_102] : memref<1x8x256xf32, #tpu.memory_space<vmem>>, vector<1x8x256xf32>
    %109 = vector.shape_cast %108 : vector<1x8x256xf32> to vector<8x256xf32>
    %110 = vector.shape_cast %107 : vector<8x256xf32> to vector<1x8x256xf32>
    tpu.vector_store %arg7[%c0_100, %c0_101, %c0_102], %110 {strides = array<i32>} : memref<1x8x256xf32, #tpu.memory_space<vmem>>, vector<1x8x256xf32>,
    return
  }
  func.func @transform_0(%arg0: i32) -> (i32, i32, i32) {
    %c0_i32 = arith.constant 0 : i32
    %c0_i32_0 = arith.constant 0 : i32
    %c0_i32_1 = arith.constant 0 : i32
    return %arg0, %c0_i32, %c0_i32_0 : i32, i32, i32
  }
  func.func @transform_1(%arg0: i32) -> (i32, i32) {
    %c0_i32 = arith.constant 0 : i32
    %c0_i32_0 = arith.constant 0 : i32
    %c0_i32_1 = arith.constant 0 : i32
    return %c0_i32, %c0_i32_0 : i32, i32
  }
  func.func @transform_2(%arg0: i32) -> (i32, i32) {
    %c0_i32 = arith.constant 0 : i32
    %c0_i32_0 = arith.constant 0 : i32
    %c0_i32_1 = arith.constant 0 : i32
    return %c0_i32, %c0_i32_0 : i32, i32
  }
  func.func @transform_3(%arg0: i32) -> (i32, i32) {
    %c0_i32 = arith.constant 0 : i32
    %c0_i32_0 = arith.constant 0 : i32
    %c0_i32_1 = arith.constant 0 : i32
    return %c0_i32, %c0_i32_0 : i32, i32
  }
  func.func @transform_4(%arg0: i32) -> (i32, i32) {
    %c0_i32 = arith.constant 0 : i32
    %c0_i32_0 = arith.constant 0 : i32
    %c0_i32_1 = arith.constant 0 : i32
    return %c0_i32, %c0_i32_0 : i32, i32
  }
  func.func @transform_5(%arg0: i32) -> (i32, i32) {
    %c0_i32 = arith.constant 0 : i32
    %c0_i32_0 = arith.constant 0 : i32
    %c0_i32_1 = arith.constant 0 : i32
    return %c0_i32, %c0_i32_0 : i32, i32
  }
  func.func @transform_6(%arg0: i32) -> (i32, i32, i32) {
    %c0_i32 = arith.constant 0 : i32
    %c0_i32_0 = arith.constant 0 : i32
    %c0_i32_1 = arith.constant 0 : i32
    return %arg0, %c0_i32, %c0_i32_0 : i32, i32, i32
  }
}

</mosaic_0001>

<llo_original>
// kernel: tpu_custom_call.1
$region0: #{tpu_custom_call.1}
  #allocation0 [shape = 'u32[]', space=smem, size = 0x4, offset = 0x4, fixed_abs, tag = 'smem constant byte address 0x4 - core index']
  #allocation1 [shape = 'u32[144,128]{1,0:T(1,128)}', space=vmem, size = 0x12000, scoped, tag = 'internal scratch']
  #allocation2 [shape = 'bf16[36,256]{1,0:T(8,128)(2,1)}', space=vmem, size = 0x5000, scoped, tag = 'scratch operand']
  #allocation3 [shape = 'bf16[72,256]{1,0:T(8,128)(2,1)}', space=vmem, size = 0x9000, scoped, tag = 'scratch operand']
  #allocation4 [shape = 'bf16[1,8,384]{2,1,0:T(8,128)(2,1)}', space=vmem, size = 0x1800, scoped, tag = 'scratch operand']
  %s0 = inlined_call_operand.vmem [shape: bf16[2,4,384], index: 0, kind: input, shape index: {}]
  %s1 = inlined_call_operand.hbm [shape: bf16[2,256], index: 1, kind: input, shape index: {}]
  %s2 = inlined_call_operand.vmem [shape: bf16[8,36], index: 2, kind: input, shape index: {}]
  %s3 = inlined_call_operand.vmem [shape: f32[8,1], index: 3, kind: input, shape index: {}]
  %s4 = inlined_call_operand.vmem [shape: bf16[8,72], index: 4, kind: input, shape index: {}]
  %s5 = inlined_call_operand.vmem [shape: f32[8,1], index: 5, kind: input, shape index: {}]
  %s6 = inlined_call_operand.hbm [shape: f32[2,8,256], index: 6, kind: output, shape index: {}]
  %s7 = sld [smem:[#allocation0]]
  $region61: #{tpu_custom_call.1} parent=0
    _
  %s9 = ssub.s32 1, %s7
  %s10 = scalar_select 0, %s9, %s7
  $region1: #{tpu_custom_call.1} parent=0
    #allocation5 [shape = 'u8[1024]{0}', space=vmem, size = 0x400, scoped, tag = 'input window, operand 1, single buffered']
    #allocation6 [shape = 's32[2]{0}', space=sflag, size = 0x8, scoped, tag = 'scoped memory for tpu_custom_call.1']
    #allocation7 [shape = 's32[2]{0}', space=sflag, size = 0x8, scoped, tag = 'scoped memory for tpu_custom_call.1']
    #allocation8 [shape = 'u8[16384]{0}', space=vmem, size = 0x4000, scoped, tag = 'output window, operand 0']
    %11 = vsyncpa [#allocation6], 0
    %12 = vsyncpa [#allocation7], 0
    %s13 = scalar_lea.sflag [#allocation7], 1
    %14 = vsyncpa %s13, 0
    loop: start=0, step=1, limit=4
    $region2: #{tpu_custom_call.1} parent=1 // loop_pre_header
      _
    $region3: #{tpu_custom_call.1} parent=1 // loop_header
      %s16 = sphi 0, %s20
      %p17 = scmp.ge.s32.totalorder %s16, 4
      %s26 = sphi 0, %s28
      %s29 = sphi 0, %s26
      %s30 = sphi 0, %s29
      %s46 = sphi 0, %s30
      %s50 = sphi 0, %s50
      %s52 = sphi 0, %s50
      %s53 = sphi 0, %s52
      %s67 = sphi 0, %s53
      %s71 = sphi 0, %s71
      %s73 = sphi 0, %s71
      %s74 = sphi 0, %s73
      %s88 = sphi 0, %s74
      %s92 = sphi 0, %s92
      %s94 = sphi 0, %s92
      %s95 = sphi 0, %s94
      %s109 = sphi 0, %s95
      %s113 = sphi 0, %s113
      %s115 = sphi 0, %s113
      %s116 = sphi 0, %s115
      %s130 = sphi 0, %s116
      %s134 = sphi 0, %s134
      %s136 = sphi 0, %s134
      %s137 = sphi 0, %s136
      %s151 = sphi 0, %s137
      %s157 = sphi 0, %s159
      %s160 = sphi 0, %s157
      %s161 = sphi 0, %s160
      %s177 = sphi 0, %s161
    $region4: #{tpu_custom_call.1} parent=1 // loop_header_branch
      %19 = sbr.rel (%p17) target = $region8
    $region5: #{tpu_custom_call.1} parent=1 // loop_body
      %s21 = ssub.s32 %s16, 1
      %s22 = ssub.s32 %s16, 2
      %s23 = sadd.s32 %s16, 1
      %s24 = ssub.s32 %s16, %s23
      %p25 = scmp.eq.s32.totalorder %s24, 0
      %s27 = sadd.s32 %s26, 1
      %s28 = scalar_select %p25, %s26, %s27
      %p31 = pneg %p25
      %p32 = scmp.eq.s32.totalorder %s16, 1
      %p33 = por %p31, %p32
      %p34 = scmp.ne.s32.totalorder %s26, %s29
      %p35 = scmp.eq.s32.totalorder %s16, 0
      %p36 = por %p34, %p35
      %p37 = scmp.ne.s32.totalorder %s26, %s29
      %p38 = scmp.eq.s32.totalorder %s21, 1
      %p39 = por %p37, %p38
      %p40 = scmp.ne.s32.totalorder %s29, %s30
      %p41 = scmp.eq.s32.totalorder %s21, 0
      %p42 = por %p40, %p41
      %p43 = scmp.ne.s32.totalorder %s29, %s30
      %p44 = scmp.eq.s32.totalorder %s22, 1
      %p45 = por %p43, %p44
      %p47 = scmp.ne.s32.totalorder %s30, %s46
      %p48 = scmp.eq.s32.totalorder %s22, 0
      %p49 = por %p47, %p48
      %s51 = sadd.s32 %s50, 1
      %p54 = scmp.eq.s32.totalorder %s16, 1
      %p55 = scmp.ne.s32.totalorder %s50, %s52
      %p56 = scmp.eq.s32.totalorder %s16, 0
      %p57 = por %p55, %p56
      %p58 = scmp.ne.s32.totalorder %s50, %s52
      %p59 = scmp.eq.s32.totalorder %s21, 1
      %p60 = por %p58, %p59
      %p61 = scmp.ne.s32.totalorder %s52, %s53
      %p62 = scmp.eq.s32.totalorder %s21, 0
      %p63 = por %p61, %p62
      %p64 = scmp.ne.s32.totalorder %s52, %s53
      %p65 = scmp.eq.s32.totalorder %s22, 1
      %p66 = por %p64, %p65
      %p68 = scmp.ne.s32.totalorder %s53, %s67
      %p69 = scmp.eq.s32.totalorder %s22, 0
      %p70 = por %p68, %p69
      %s72 = sadd.s32 %s71, 1
      %p75 = scmp.eq.s32.totalorder %s16, 1
      %p76 = scmp.ne.s32.totalorder %s71, %s73
      %p77 = scmp.eq.s32.totalorder %s16, 0
      %p78 = por %p76, %p77
      %p79 = scmp.ne.s32.totalorder %s71, %s73
      %p80 = scmp.eq.s32.totalorder %s21, 1
      %p81 = por %p79, %p80
      %p82 = scmp.ne.s32.totalorder %s73, %s74
      %p83 = scmp.eq.s32.totalorder %s21, 0
      %p84 = por %p82, %p83
      %p85 = scmp.ne.s32.totalorder %s73, %s74
      %p86 = scmp.eq.s32.totalorder %s22, 1
      %p87 = por %p85, %p86
      %p89 = scmp.ne.s32.totalorder %s74, %s88
      %p90 = scmp.eq.s32.totalorder %s22, 0
      %p91 = por %p89, %p90
      %s93 = sadd.s32 %s92, 1
      %p96 = scmp.eq.s32.totalorder %s16, 1
      %p97 = scmp.ne.s32.totalorder %s92, %s94
      %p98 = scmp.eq.s32.totalorder %s16, 0
      %p99 = por %p97, %p98
      %p100 = scmp.ne.s32.totalorder %s92, %s94
      %p101 = scmp.eq.s32.totalorder %s21, 1
      %p102 = por %p100, %p101
      %p103 = scmp.ne.s32.totalorder %s94, %s95
      %p104 = scmp.eq.s32.totalorder %s21, 0
      %p105 = por %p103, %p104
      %p106 = scmp.ne.s32.totalorder %s94, %s95
      %p107 = scmp.eq.s32.totalorder %s22, 1
      %p108 = por %p106, %p107
      %p110 = scmp.ne.s32.totalorder %s95, %s109
      %p111 = scmp.eq.s32.totalorder %s22, 0
      %p112 = por %p110, %p111
      %s114 = sadd.s32 %s113, 1
      %p117 = scmp.eq.s32.totalorder %s16, 1
      %p118 = scmp.ne.s32.totalorder %s113, %s115
      %p119 = scmp.eq.s32.totalorder %s16, 0
      %p120 = por %p118, %p119
      %p121 = scmp.ne.s32.totalorder %s113, %s115
      %p122 = scmp.eq.s32.totalorder %s21, 1
      %p123 = por %p121, %p122
      %p124 = scmp.ne.s32.totalorder %s115, %s116
      %p125 = scmp.eq.s32.totalorder %s21, 0
      %p126 = por %p124, %p125
      %p127 = scmp.ne.s32.totalorder %s115, %s116
      %p128 = scmp.eq.s32.totalorder %s22, 1
      %p129 = por %p127, %p128
      %p131 = scmp.ne.s32.totalorder %s116, %s130
      %p132 = scmp.eq.s32.totalorder %s22, 0
      %p133 = por %p131, %p132
      %s135 = sadd.s32 %s134, 1
      %p138 = scmp.eq.s32.totalorder %s16, 1
      %p139 = scmp.ne.s32.totalorder %s134, %s136
      %p140 = scmp.eq.s32.totalorder %s16, 0
      %p141 = por %p139, %p140
      %p142 = scmp.ne.s32.totalorder %s134, %s136
      %p143 = scmp.eq.s32.totalorder %s21, 1
      %p144 = por %p142, %p143
      %p145 = scmp.ne.s32.totalorder %s136, %s137
      %p146 = scmp.eq.s32.totalorder %s21, 0
      %p147 = por %p145, %p146
      %p148 = scmp.ne.s32.totalorder %s136, %s137
      %p149 = scmp.eq.s32.totalorder %s22, 1
      %p150 = por %p148, %p149
      %p152 = scmp.ne.s32.totalorder %s137, %s151
      %p153 = scmp.eq.s32.totalorder %s22, 0
      %p154 = por %p152, %p153
      %s155 = ssub.s32 %s16, %s23
      %p156 = scmp.eq.s32.totalorder %s155, 0
      %s158 = sadd.s32 %s157, 1
      %s159 = scalar_select %p156, %s157, %s158
      %p162 = pneg %p156
      %p163 = scmp.eq.s32.totalorder %s16, 1
      %p164 = por %p162, %p163
      %p165 = scmp.ne.s32.totalorder %s157, %s160
      %p166 = scmp.eq.s32.totalorder %s16, 0
      %p167 = por %p165, %p166
      %p168 = scmp.ne.s32.totalorder %s157, %s160
      %p169 = scmp.eq.s32.totalorder %s21, 1
      %p170 = por %p168, %p169
      %p171 = scmp.ne.s32.totalorder %s160, %s161
      %p172 = scmp.eq.s32.totalorder %s21, 0
      %p173 = por %p171, %p172
      %p174 = scmp.ne.s32.totalorder %s160, %s161
      %p175 = scmp.eq.s32.totalorder %s22, 1
      %p176 = por %p174, %p175
      %p178 = scmp.ne.s32.totalorder %s161, %s177
      %p179 = scmp.eq.s32.totalorder %s22, 0
      %p180 = por %p178, %p179
      %p181 = scmp.le.s32.totalorder 1, %s16
      %p182 = scmp.lt.s32.totalorder %s16, 3
      %p183 = pnand %p181, %p182
      %p184 = pneg %p183
      // Predicated region
      $region9: #{tpu_custom_call.1} parent=5 // pred_check
        _
      $region10: #{tpu_custom_call.1} parent=5 // pred_check_branch
        %186 = sbr.rel (%p183) target = $region12
      $region11: #{tpu_custom_call.1} parent=5 // pred_region
        %s187 = ssub.s32 %s16, 1
        // Predicated region
        $region13: #{tpu_custom_call.1} parent=11 // pred_check
          %p188 = pneg %p63
        $region14: #{tpu_custom_call.1} parent=11 // pred_check_branch
          %190 = sbr.rel (%p188) target = $region16
        $region15: #{tpu_custom_call.1} parent=11 // pred_region
          %s192 = ssub.s32 32, 32
          %193 = vsyncadd [#allocation6], %s192
          %s195 = sshll.u32 [#allocation5], 4
          %s196 = int_to_ptr.vmem [resolvable:$true] %s195
          %198 = dma.hbm_to_vmem [thread:$0]  %s1, 32, %s196, [#allocation6]
        $region16: #{tpu_custom_call.1} parent=11 // pred_fallthru
          _
        // Predicated region
        $region17: #{tpu_custom_call.1} parent=11 // pred_check
          %p199 = pneg %p84
        $region18: #{tpu_custom_call.1} parent=11 // pred_check_branch
          %201 = sbr.rel (%p199) target = $region20
        $region19: #{tpu_custom_call.1} parent=11 // pred_region
          _
        $region20: #{tpu_custom_call.1} parent=11 // pred_fallthru
          _
        // Predicated region
        $region21: #{tpu_custom_call.1} parent=11 // pred_check
          %p202 = pneg %p105
        $region22: #{tpu_custom_call.1} parent=11 // pred_check_branch
          %204 = sbr.rel (%p202) target = $region24
        $region23: #{tpu_custom_call.1} parent=11 // pred_region
          _
        $region24: #{tpu_custom_call.1} parent=11 // pred_fallthru
          _
        // Predicated region
        $region25: #{tpu_custom_call.1} parent=11 // pred_check
          %p205 = pneg %p126
        $region26: #{tpu_custom_call.1} parent=11 // pred_check_branch
          %207 = sbr.rel (%p205) target = $region28
        $region27: #{tpu_custom_call.1} parent=11 // pred_region
          _
        $region28: #{tpu_custom_call.1} parent=11 // pred_fallthru
          _
        // Predicated region
        $region29: #{tpu_custom_call.1} parent=11 // pred_check
          %p208 = pneg %p147
        $region30: #{tpu_custom_call.1} parent=11 // pred_check_branch
          %210 = sbr.rel (%p208) target = $region32
        $region31: #{tpu_custom_call.1} parent=11 // pred_region
          _
        $region32: #{tpu_custom_call.1} parent=11 // pred_fallthru
          _
      $region12: #{tpu_custom_call.1} parent=5 // pred_fallthru
        _
      %p211 = scmp.lt.s32.totalorder %s16, 2
      // Predicated region
      $region33: #{tpu_custom_call.1} parent=5 // pred_check
        %p212 = pneg %p211
      $region34: #{tpu_custom_call.1} parent=5 // pred_check_branch
        %214 = sbr.rel (%p212) target = $region36
      $region35: #{tpu_custom_call.1} parent=5 // pred_region
        // Predicated region
        $region37: #{tpu_custom_call.1} parent=35 // pred_check
          %p215 = pneg %p36
        $region38: #{tpu_custom_call.1} parent=35 // pred_check_branch
          %217 = sbr.rel (%p215) target = $region40
        $region39: #{tpu_custom_call.1} parent=35 // pred_region
          %p218 = scmp.lt.s32.totalorder %s16, 1
          %s219 = scalar_select %p218, %s16, 1
          %s220 = smul.addr %s219, 3
          %s221 = smul.addr %s220, 2
          %s222 = scalar_lea.vmem %s0, %s221
        $region40: #{tpu_custom_call.1} parent=35 // pred_fallthru
          _
      $region36: #{tpu_custom_call.1} parent=5 // pred_fallthru
        _
      %p223 = scmp.le.s32.totalorder 1, %s16
      %p224 = scmp.lt.s32.totalorder %s16, 3
      %p225 = pnand %p223, %p224
      %p226 = pneg %p225
      // Predicated region
      $region41: #{tpu_custom_call.1} parent=5 // pred_check
        _
      $region42: #{tpu_custom_call.1} parent=5 // pred_check_branch
        %228 = sbr.rel (%p225) target = $region44
      $region43: #{tpu_custom_call.1} parent=5 // pred_region
        %s229 = ssub.s32 %s16, 1
        // Predicated region
        $region45: #{tpu_custom_call.1} parent=43 // pred_check
          %p230 = pneg %p63
        $region46: #{tpu_custom_call.1} parent=43 // pred_check_branch
          %232 = sbr.rel (%p230) target = $region48
        $region47: #{tpu_custom_call.1} parent=43 // pred_region
          %233 = dma.done [#allocation6], 32
        $region48: #{tpu_custom_call.1} parent=43 // pred_fallthru
          _
        %p234 = scmp.lt.s32.totalorder %s21, 1
        %s235 = scalar_select %p234, %s21, 1
        %s236 = smul.addr %s235, 3
        %s237 = smul.addr %s236, 2
        %s238 = scalar_lea.vmem %s0, %s237
        %p239 = pneg %p42
        %p240 = pneg %p39
        %p241 = pneg %p63
        %p242 = pneg %p60
        %p243 = pneg %p84
        %p244 = pneg %p81
        %p245 = pneg %p105
        %p246 = pneg %p102
        %p247 = pneg %p126
        %p248 = pneg %p123
        %p249 = pneg %p147
        %p250 = pneg %p144
        %p251 = pneg %p173
        %p252 = pneg %p170
        %s253 = sand.u32 %s160, 1
        %s254 = scalar_lea.sflag [#allocation7], %s253
        %s255 = sand.u32 %s160, 1
        %s256 = smul.addr %s255, 16
        %s257 = scalar_lea.vmem [#allocation8], %s256
        %p258 = scmp.lt.s32.totalorder %s21, 1
        %s259 = scalar_select %p258, %s21, 1
        %s260 = smul.addr %s259, 3
        %s261 = smul.addr %s260, 2
        %s262 = scalar_lea.vmem %s0, %s261
        %v264 = vld [vmem:[#allocation5] sm:$0x3]
        %v265 = vld [vmem:[%s262] sm:$0xf]
        %v268 = vunpack.c.l.s4 1966171168
        %v269 = vunpack.c.0.s8 %v268
        %v270 = vlaneseq
        %v271 = vshrl.u32 %v270, 7
        %v272 = vsub.s32 %v269, %v271
        %v273 = vrot.slane %v264, %v272
        %v274 = vcombine.high %v273, %v273
        %v276 = vunpack.c.l.s4 1966171168
        %v277 = vunpack.c.0.s8 %v276
        %v278 = vlaneseq
        %v279 = vshrl.u32 %v278, 7
        %v280 = vsub.s32 %v277, %v279
        %v281 = vrot.slane %v273, %v280
        %v283 = vunpack.c.l.s4 1966171168
        %v284 = vunpack.c.0.s8 %v283
        %v285 = vlaneseq
        %v286 = vshrl.u32 %v285, 7
        %v287 = vsub.s32 %v284, %v286
        %v288 = vrot.slane %v274, %v287
        %v290 = vpack.i.b16 %v281, %v281
        %v292 = vlaneseq
        %v293 = vshrl.u32 %v292, 7
        %v294 = vsub.s32 0, %v293
        %v295 = vrot.slane %v290, %v294
        %v297 = vpack.i.b16 %v288, %v288
        %v299 = vlaneseq
        %v300 = vshrl.u32 %v299, 7
        %v301 = vsub.s32 0, %v300
        %v302 = vrot.slane %v297, %v301
        %v305 = vcombine.low %v295, %v302
        %v307 = vunpack.c.l.s4 1983009808
        %v308 = vunpack.c.0.s8 %v307
        %v309 = vlaneseq
        %v310 = vshrl.u32 %v309, 7
        %v311 = vsub.s32 %v308, %v310
        %v312 = vrot.slane %v305, %v311
        %v314 = vmul.bf16 %v265, %v312
        %v317 = vunpack.c.l.s4 1983009808
        %v318 = vunpack.c.0.s8 %v317
        %v319 = vlaneseq
        %v320 = vshrl.u32 %v319, 7
        %v321 = vsub.s32 %v318, %v320
        %v322 = vrot.slane %v314, %v321
        %324 = vst [vmem:[#allocation2] sm:$0x33] %v322
        %v325 = vld [vmem:[%s262] sm:$0x3f]
        %v327 = vcombine.low %v325, %v325
        %v329 = vunpack.c.l.s4 1983009808
        %v330 = vunpack.c.0.s8 %v329
        %v331 = vlaneseq
        %v332 = vshrl.u32 %v331, 7
        %v333 = vsub.s32 %v330, %v332
        %v334 = vrot.slane %v327, %v333
        %v336 = vunpack.c.l.s4 1983009808
        %v337 = vunpack.c.0.s8 %v336
        %v338 = vlaneseq
        %v339 = vshrl.u32 %v338, 7
        %v340 = vsub.s32 %v337, %v339
        %v341 = vrot.slane %v325, %v340
        %342 = vrot.lane.b32.xlu0 %v334, 127
        %v343 = vpop.permute.xlu0 %342
        %344 = vrot.lane.b32.xlu0 %v341, 127
        %v345 = vpop.permute.xlu0 %344
        %v346 = vrot.slane %v343, 4
        %v347 = vrot.slane %v345, 4
        %vm348 = vcmask 1043456
        %v349 = vsel %vm348, %v346, %v347
        %vm350 = vcmask 1039360
        %v351 = vsel %vm350, %v343, %v349
        %353 = vst [vmem:[#allocation2] sm:$0xcc] %v351
        %v354 = vld [vmem:[%s262] sm:$0x3f]
        %v355 = vshrl.u32 %v281, 16
        %v356 = vpack.i.b16 %v355, %v355
        %v358 = vlaneseq
        %v359 = vshrl.u32 %v358, 7
        %v360 = vsub.s32 0, %v359
        %v361 = vrot.slane %v356, %v360
        %v362 = vshrl.u32 %v288, 16
        %v363 = vpack.i.b16 %v362, %v362
        %v365 = vlaneseq
        %v366 = vshrl.u32 %v365, 7
        %v367 = vsub.s32 0, %v366
        %v368 = vrot.slane %v363, %v367
        %v371 = vcombine.low %v361, %v368
        %v373 = vunpack.c.l.s4 1983009808
        %v374 = vunpack.c.0.s8 %v373
        %v375 = vlaneseq
        %v376 = vshrl.u32 %v375, 7
        %v377 = vsub.s32 %v374, %v376
        %v378 = vrot.slane %v371, %v377
        %379 = vrot.lane.b32.xlu0 %v378, 2
        %v380 = vpop.permute.xlu0 %379
        %v381 = vrot.slane %v380, 6
        %vm382 = vcmask 15360
        %v383 = vsel %vm382, %v381, %v380
        %v385 = vmul.bf16 %v354, %v383
        %v387 = vcombine.high %v385, %v385
        %v389 = vunpack.c.l.s4 1983009808
        %v390 = vunpack.c.0.s8 %v389
        %v391 = vlaneseq
        %v392 = vshrl.u32 %v391, 7
        %v393 = vsub.s32 %v390, %v392
        %v394 = vrot.slane %v385, %v393
        %v396 = vunpack.c.l.s4 1983009808
        %v397 = vunpack.c.0.s8 %v396
        %v398 = vlaneseq
        %v399 = vshrl.u32 %v398, 7
        %v400 = vsub.s32 %v397, %v399
        %v401 = vrot.slane %v387, %v400
        %402 = vrot.lane.b32.xlu0 %v394, 126
        %v403 = vpop.permute.xlu0 %402
        %404 = vrot.lane.b32.xlu0 %v401, 126
        %v405 = vpop.permute.xlu0 %404
        %v406 = vrot.slane %v403, 4
        %v407 = vrot.slane %v405, 4
        %v408 = vsel %vm348, %v406, %v407
        %vm409 = vcmask 1031168
        %v410 = vsel %vm409, %v403, %v408
        %412 = vst [vmem:[#allocation2 + $0x8] sm:$0x33] %v410
        %v413 = vld [vmem:[%s262] sm:$0x3f]
        %414 = vrot.lane.b32.xlu0 %v312, 16
        %v415 = vpop.permute.xlu0 %414
        %v416 = vrot.slane %v415, 6
        %vm417 = vcmask 130048
        %v418 = vsel %vm417, %v416, %v415
        %v420 = vmul.bf16 %v413, %v418
        %v422 = vcombine.low %v420, %v420
        %v424 = vunpack.c.l.s4 1983009808
        %v425 = vunpack.c.0.s8 %v424
        %v426 = vlaneseq
        %v427 = vshrl.u32 %v426, 7
        %v428 = vsub.s32 %v425, %v427
        %v429 = vrot.slane %v422, %v428
        %v431 = vunpack.c.l.s4 1983009808
        %v432 = vunpack.c.0.s8 %v431
        %v433 = vlaneseq
        %v434 = vshrl.u32 %v433, 7
        %v435 = vsub.s32 %v432, %v434
        %v436 = vrot.slane %v420, %v435
        %437 = vrot.lane.b32.xlu0 %v429, 112
        %v438 = vpop.permute.xlu0 %437
        %439 = vrot.lane.b32.xlu0 %v436, 112
        %v440 = vpop.permute.xlu0 %439
        %v441 = vrot.slane %v438, 4
        %v442 = vrot.slane %v440, 4
        %v443 = vsel %vm348, %v441, %v442
        %vm444 = vcmask 916480
        %v445 = vsel %vm444, %v438, %v443
        %447 = vst [vmem:[#allocation2 + $0x8] sm:$0xcc] %v445
        %v448 = vld [vmem:[%s262] sm:$0x3f]
        %v450 = vcombine.high %v448, %v448
        %v452 = vunpack.c.l.s4 1983009808
        %v453 = vunpack.c.0.s8 %v452
        %v454 = vlaneseq
        %v455 = vshrl.u32 %v454, 7
        %v456 = vsub.s32 %v453, %v455
        %v457 = vrot.slane %v448, %v456
        %v459 = vunpack.c.l.s4 1983009808
        %v460 = vunpack.c.0.s8 %v459
        %v461 = vlaneseq
        %v462 = vshrl.u32 %v461, 7
        %v463 = vsub.s32 %v460, %v462
        %v464 = vrot.slane %v450, %v463
        %465 = vrot.lane.b32.xlu0 %v457, 111
        %v466 = vpop.permute.xlu0 %465
        %467 = vrot.lane.b32.xlu0 %v464, 111
        %v468 = vpop.permute.xlu0 %467
        %v469 = vrot.slane %v466, 4
        %v470 = vrot.slane %v468, 4
        %v471 = vsel %vm348, %v469, %v470
        %vm472 = vcmask 908288
        %v473 = vsel %vm472, %v466, %v471
        %475 = vst [vmem:[#allocation2 + $0x10] sm:$0x33] %v473
        %v476 = vld [vmem:[%s262] sm:$0x3f]
        %477 = vrot.lane.b32.xlu0 %v378, 18
        %v478 = vpop.permute.xlu0 %477
        %v479 = vrot.slane %v478, 6
        %vm480 = vcmask 146432
        %v481 = vsel %vm480, %v479, %v478
        %v483 = vmul.bf16 %v476, %v481
        %v485 = vcombine.low %v483, %v483
        %v487 = vunpack.c.l.s4 1983009808
        %v488 = vunpack.c.0.s8 %v487
        %v489 = vlaneseq
        %v490 = vshrl.u32 %v489, 7
        %v491 = vsub.s32 %v488, %v490
        %v492 = vrot.slane %v485, %v491
        %v494 = vunpack.c.l.s4 1983009808
        %v495 = vunpack.c.0.s8 %v494
        %v496 = vlaneseq
        %v497 = vshrl.u32 %v496, 7
        %v498 = vsub.s32 %v495, %v497
        %v499 = vrot.slane %v483, %v498
        %500 = vrot.lane.b32.xlu0 %v492, 110
        %v501 = vpop.permute.xlu0 %500
        %502 = vrot.lane.b32.xlu0 %v499, 110
        %v503 = vpop.permute.xlu0 %502
        %v504 = vrot.slane %v501, 4
        %v505 = vrot.slane %v503, 4
        %v506 = vsel %vm348, %v504, %v505
        %vm507 = vcmask 900096
        %v508 = vsel %vm507, %v501, %v506
        %510 = vst [vmem:[#allocation2 + $0x10] sm:$0xcc] %v508
        %v511 = vld [vmem:[%s262] sm:$0x3f]
        %512 = vrot.lane.b32.xlu0 %v312, 32
        %v513 = vpop.permute.xlu0 %512
        %v514 = vrot.slane %v513, 6
        %vm515 = vcmask 261120
        %v516 = vsel %vm515, %v514, %v513
        %v518 = vmul.bf16 %v511, %v516
        %v520 = vcombine.high %v518, %v518
        %v522 = vunpack.c.l.s4 1983009808
        %v523 = vunpack.c.0.s8 %v522
        %v524 = vlaneseq
        %v525 = vshrl.u32 %v524, 7
        %v526 = vsub.s32 %v523, %v525
        %v527 = vrot.slane %v518, %v526
        %v529 = vunpack.c.l.s4 1983009808
        %v530 = vunpack.c.0.s8 %v529
        %v531 = vlaneseq
        %v532 = vshrl.u32 %v531, 7
        %v533 = vsub.s32 %v530, %v532
        %v534 = vrot.slane %v520, %v533
        %535 = vrot.lane.b32.xlu0 %v527, 96
        %v536 = vpop.permute.xlu0 %535
        %537 = vrot.lane.b32.xlu0 %v534, 96
        %v538 = vpop.permute.xlu0 %537
        %v539 = vrot.slane %v536, 4
        %v540 = vrot.slane %v538, 4
        %v541 = vsel %vm348, %v539, %v540
        %vm542 = vcmask 785408
        %v543 = vsel %vm542, %v536, %v541
        %545 = vst [vmem:[#allocation2 + $0x18] sm:$0x33] %v543
        %v546 = vld [vmem:[%s262] sm:$0x3f]
        %v548 = vcombine.low %v546, %v546
        %v550 = vunpack.c.l.s4 1983009808
        %v551 = vunpack.c.0.s8 %v550
        %v552 = vlaneseq
        %v553 = vshrl.u32 %v552, 7
        %v554 = vsub.s32 %v551, %v553
        %v555 = vrot.slane %v548, %v554
        %v557 = vunpack.c.l.s4 1983009808
        %v558 = vunpack.c.0.s8 %v557
        %v559 = vlaneseq
        %v560 = vshrl.u32 %v559, 7
        %v561 = vsub.s32 %v558, %v560
        %v562 = vrot.slane %v546, %v561
        %563 = vrot.lane.b32.xlu0 %v555, 95
        %v564 = vpop.permute.xlu0 %563
        %565 = vrot.lane.b32.xlu0 %v562, 95
        %v566 = vpop.permute.xlu0 %565
        %v567 = vrot.slane %v564, 4
        %v568 = vrot.slane %v566, 4
        %v569 = vsel %vm348, %v567, %v568
        %vm570 = vcmask 777216
        %v571 = vsel %vm570, %v564, %v569
        %573 = vst [vmem:[#allocation2 + $0x18] sm:$0xcc] %v571
        %v574 = vld [vmem:[%s262] sm:$0x3f]
        %575 = vrot.lane.b32.xlu0 %v378, 34
        %v576 = vpop.permute.xlu0 %575
        %v577 = vrot.slane %v576, 6
        %vm578 = vcmask 277504
        %v579 = vsel %vm578, %v577, %v576
        %v581 = vmul.bf16 %v574, %v579
        %v583 = vcombine.high %v581, %v581
        %v585 = vunpack.c.l.s4 1983009808
        %v586 = vunpack.c.0.s8 %v585
        %v587 = vlaneseq
        %v588 = vshrl.u32 %v587, 7
        %v589 = vsub.s32 %v586, %v588
        %v590 = vrot.slane %v581, %v589
        %v592 = vunpack.c.l.s4 1983009808
        %v593 = vunpack.c.0.s8 %v592
        %v594 = vlaneseq
        %v595 = vshrl.u32 %v594, 7
        %v596 = vsub.s32 %v593, %v595
        %v597 = vrot.slane %v583, %v596
        %598 = vrot.lane.b32.xlu0 %v590, 94
        %v599 = vpop.permute.xlu0 %598
        %600 = vrot.lane.b32.xlu0 %v597, 94
        %v601 = vpop.permute.xlu0 %600
        %v602 = vrot.slane %v599, 4
        %v603 = vrot.slane %v601, 4
        %v604 = vsel %vm348, %v602, %v603
        %vm605 = vcmask 769024
        %v606 = vsel %vm605, %v599, %v604
        %608 = vst [vmem:[#allocation2 + $0x20] sm:$0x33] %v606
        %v609 = vld [vmem:[%s2] sm:$0xf]
        %v610 = vld [vmem:[#allocation2] sm:$0xff]
        %v611 = vld [vmem:[#allocation2 + $0x8] sm:$0xff]
        %v612 = vld [vmem:[#allocation2 + $0x10] sm:$0xff]
        %v613 = vld [vmem:[#allocation2 + $0x18] sm:$0xff]
        %v614 = vld [vmem:[#allocation2 + $0x20] sm:$0x33]
        %v615 = vld [vmem:[%s3] sm:$0xff]
        %617 = vset.pattern.permute.xlu0 0
        %618 = vperm.xlu0 %617, %v615
        %v619 = vpop.permute.xlu0 %618
        %v626 = vunpack.c.l.b16 %v610
        %v627 = vunpack.c.h.b16 %v610
        %v628 = vunpack.c.l.b16 %v611
        %v629 = vunpack.c.h.b16 %v611
        %v630 = vunpack.c.l.b16 %v612
        %v631 = vunpack.c.h.b16 %v612
        %v632 = vunpack.c.l.b16 %v613
        %v633 = vunpack.c.h.b16 %v613
        %v634 = vunpack.c.l.b16 %v614
        %v635 = vunpack.c.h.b16 %v614
        %v636 = vpack.c.b16 %v628, %v626
        %v637 = vpack.c.b16 %v629, %v627
        %v638 = vpack.c.b16 %v632, %v630
        %v639 = vpack.c.b16 %v633, %v631
        %v640 = vpack.c.b16 %v634, %v634
        %v641 = vpack.c.b16 %v635, %v635
        %vm646 = vcmask 293888
        %v648 = vsel %vm646, %v609, 0
        %vm650 = vcmask 1041408
        %v652 = vsel %vm650, %v640, 0
        %v655 = vsel %vm650, %v641, 0
        %657 = vmatprep.subr.bf16.mxu0 0
        %658 = vmatpush1.bf16.msra.mxu0 0
        %659 = vmatprep.subr.bf16.mxu0 0
        %660 = vmatpush1.bf16.msra.mxu0 0
        %661 = vmatprep.subr.bf16.mxu0 0
        %662 = vmatpush1.bf16.msra.mxu0 0
        %663 = vmatprep.subr.bf16.mxu0 0
        %664 = vmatpush1.bf16.msra.mxu0 0
        %665 = vmatprep.subr.bf16.mxu0 0
        %666 = vmatpush1.bf16.msra.mxu0 0
        %667 = vmatprep.subr.bf16.mxu0 %v655
        %668 = vmatpush1.bf16.msra.mxu0 %v652
        %669 = vmatprep.subr.bf16.mxu0 %v639
        %670 = vmatpush1.bf16.msra.mxu0 %v638
        %671 = vmatprep.subr.bf16.mxu0 %v637
        %672 = vmatpush1.bf16.msra.mxu0 %v636
        %673 = vmatprep.subr.bf16.mxu0 0
        %674 = vmatpush2.bf16.msra.mxu0 0
        %675 = vmatprep.subr.bf16.mxu0 0
        %676 = vmatpush2.bf16.msra.mxu0 0
        %677 = vmatprep.subr.bf16.mxu0 0
        %678 = vmatpush2.bf16.msra.mxu0 0
        %679 = vmatprep.subr.bf16.mxu0 0
        %680 = vmatpush2.bf16.msra.mxu0 0
        %681 = vmatprep.subr.bf16.mxu0 0
        %682 = vmatpush2.bf16.msra.mxu0 0
        %683 = vmatprep.subr.bf16.mxu0 0
        %684 = vmatpush2.bf16.msra.mxu0 0
        %685 = vmatprep.subr.bf16.mxu0 0
        %686 = vmatpush2.bf16.msra.mxu0 0
        %687 = vmatprep.subr.bf16.mxu0 0
        %688 = vmatpush2.bf16.msra.mxu0 0
        %689 = vmatprep.mubr.bf16.mxu0 0
        %690 = vmatmul.mubr.bf16.gmra.mxu0 %v648
        %v691 = vpop.f32.mrf.mxu0
        %v692 = vadd.f32 %v619, %v691
        %v693 = vpop.f32.mrf.mxu0
        %v694 = vadd.f32 %v619, %v693
        %v695 = vpop.f32.mrf.mxu0
        %v696 = vpop.f32.mrf.mxu0
        %697 = vdwg.mxu0
        %v698 = vmax.f32 %v692, 0.0
        %v699 = vmax.f32 %v694, 0.0
        %vm700 = vcmask 134144
        %701 = vst.msk [vmem:[#allocation4] sm:$0xf] %vm700, 0
        %vm702 = vcmask 273544
        %703 = vst.msk [vmem:[#allocation4 + $0x8] sm:$0xf] %vm702, 0
        %v704 = vpack.c.bf16 %v698, %v698
        %v705 = vpack.c.bf16 %v699, %v699
        %v708 = vunpack.c.l.b16 %v704
        %v709 = vunpack.c.l.b16 %v705
        %v710 = vpack.c.b16 %v709, %v708
        %711 = vrot.lane.b32.xlu0 %v710, 17
        %v712 = vpop.permute.xlu0 %711
        %v713 = vrot.slane %v712, 4
        %vm714 = vcmask 138240
        %v715 = vsel %vm714, %v713, %v712
        %vm718 = vcmask 1043592
        %vm719 = vcmask 1047556
        %vm720 = vmor %vm719, %vm718
        %721 = vst.msk [vmem:[#allocation4] sm:$0xff] %vm720, %v715
        %722 = vst.msk [vmem:[#allocation4 + $0x8] sm:$0xf] %vm700, %v713
        %v723 = vld [vmem:[#allocation4] sm:$0xff]
        %v724 = vunpack.c.l.b16 %v295
        %v725 = vunpack.c.l.b16 %v302
        %v726 = vpack.c.b16 %v725, %v724
        %v728 = vmul.bf16 %v723, %v726
        %729 = vst [vmem:[#allocation3] sm:$0xff] %v728
        %v730 = vld [vmem:[#allocation4] sm:$0xff]
        %v731 = vld [vmem:[#allocation4 + $0x8] sm:$0xf]
        %734 = vrot.lane.b32.xlu0 %v730, 127
        %v735 = vpop.permute.xlu0 %734
        %736 = vrot.lane.b32.xlu0 %v731, 127
        %v737 = vpop.permute.xlu0 %736
        %v738 = vrot.slane %v735, 4
        %v739 = vrot.slane %v737, 4
        %v740 = vsel %vm348, %v738, %v739
        %v741 = vsel %vm350, %v735, %v740
        %743 = vst [vmem:[#allocation3 + $0x8] sm:$0xff] %v741
        %v744 = vld [vmem:[#allocation4] sm:$0xff]
        %v745 = vld [vmem:[#allocation4 + $0x8] sm:$0xf]
        %v746 = vunpack.c.l.b16 %v361
        %v747 = vunpack.c.l.b16 %v368
        %v748 = vpack.c.b16 %v747, %v746
        %749 = vrot.lane.b32.xlu0 %v748, 2
        %v750 = vpop.permute.xlu0 %749
        %v751 = vrot.slane %v750, 4
        %v752 = vsel %vm382, %v751, %v750
        %v755 = vmul.bf16 %v744, %v752
        %v756 = vmul.bf16 %v745, %v751
        %759 = vrot.lane.b32.xlu0 %v755, 126
        %v760 = vpop.permute.xlu0 %759
        %761 = vrot.lane.b32.xlu0 %v756, 126
        %v762 = vpop.permute.xlu0 %761
        %v763 = vrot.slane %v760, 4
        %v764 = vrot.slane %v762, 4
        %v765 = vsel %vm348, %v763, %v764
        %v766 = vsel %vm409, %v760, %v765
        %768 = vst [vmem:[#allocation3 + $0x10] sm:$0xff] %v766
        %v769 = vld [vmem:[#allocation4] sm:$0xff]
        %v770 = vld [vmem:[#allocation4 + $0x8] sm:$0xf]
        %771 = vrot.lane.b32.xlu0 %v726, 16
        %v772 = vpop.permute.xlu0 %771
        %v773 = vrot.slane %v772, 4
        %v774 = vsel %vm417, %v773, %v772
        %v777 = vmul.bf16 %v769, %v774
        %v778 = vmul.bf16 %v770, %v773
        %781 = vrot.lane.b32.xlu0 %v777, 112
        %v782 = vpop.permute.xlu0 %781
        %783 = vrot.lane.b32.xlu0 %v778, 112
        %v784 = vpop.permute.xlu0 %783
        %v785 = vrot.slane %v782, 4
        %v786 = vrot.slane %v784, 4
        %v787 = vsel %vm348, %v785, %v786
        %v788 = vsel %vm444, %v782, %v787
        %790 = vst [vmem:[#allocation3 + $0x18] sm:$0xff] %v788
        %v791 = vld [vmem:[#allocation4] sm:$0xff]
        %v792 = vld [vmem:[#allocation4 + $0x8] sm:$0xf]
        %795 = vrot.lane.b32.xlu0 %v791, 111
        %v796 = vpop.permute.xlu0 %795
        %797 = vrot.lane.b32.xlu0 %v792, 111
        %v798 = vpop.permute.xlu0 %797
        %v799 = vrot.slane %v796, 4
        %v800 = vrot.slane %v798, 4
        %v801 = vsel %vm348, %v799, %v800
        %v802 = vsel %vm472, %v796, %v801
        %804 = vst [vmem:[#allocation3 + $0x20] sm:$0xff] %v802
        %v805 = vld [vmem:[#allocation4] sm:$0xff]
        %v806 = vld [vmem:[#allocation4 + $0x8] sm:$0xf]
        %807 = vrot.lane.b32.xlu0 %v748, 18
        %v808 = vpop.permute.xlu0 %807
        %v809 = vrot.slane %v808, 4
        %v810 = vsel %vm480, %v809, %v808
        %v813 = vmul.bf16 %v805, %v810
        %v814 = vmul.bf16 %v806, %v809
        %817 = vrot.lane.b32.xlu0 %v813, 110
        %v818 = vpop.permute.xlu0 %817
        %819 = vrot.lane.b32.xlu0 %v814, 110
        %v820 = vpop.permute.xlu0 %819
        %v821 = vrot.slane %v818, 4
        %v822 = vrot.slane %v820, 4
        %v823 = vsel %vm348, %v821, %v822
        %v824 = vsel %vm507, %v818, %v823
        %826 = vst [vmem:[#allocation3 + $0x28] sm:$0xff] %v824
        %v827 = vld [vmem:[#allocation4] sm:$0xff]
        %v828 = vld [vmem:[#allocation4 + $0x8] sm:$0xf]
        %829 = vrot.lane.b32.xlu0 %v726, 32
        %v830 = vpop.permute.xlu0 %829
        %v831 = vrot.slane %v830, 4
        %v832 = vsel %vm515, %v831, %v830
        %v835 = vmul.bf16 %v827, %v832
        %v836 = vmul.bf16 %v828, %v831
        %839 = vrot.lane.b32.xlu0 %v835, 96
        %v840 = vpop.permute.xlu0 %839
        %841 = vrot.lane.b32.xlu0 %v836, 96
        %v842 = vpop.permute.xlu0 %841
        %v843 = vrot.slane %v840, 4
        %v844 = vrot.slane %v842, 4
        %v845 = vsel %vm348, %v843, %v844
        %v846 = vsel %vm542, %v840, %v845
        %848 = vst [vmem:[#allocation3 + $0x30] sm:$0xff] %v846
        %v849 = vld [vmem:[#allocation4] sm:$0xff]
        %v850 = vld [vmem:[#allocation4 + $0x8] sm:$0xf]
        %853 = vrot.lane.b32.xlu0 %v849, 95
        %v854 = vpop.permute.xlu0 %853
        %855 = vrot.lane.b32.xlu0 %v850, 95
        %v856 = vpop.permute.xlu0 %855
        %v857 = vrot.slane %v854, 4
        %v858 = vrot.slane %v856, 4
        %v859 = vsel %vm348, %v857, %v858
        %v860 = vsel %vm570, %v854, %v859
        %862 = vst [vmem:[#allocation3 + $0x38] sm:$0xff] %v860
        %v863 = vld [vmem:[#allocation4] sm:$0xff]
        %v864 = vld [vmem:[#allocation4 + $0x8] sm:$0xf]
        %865 = vrot.lane.b32.xlu0 %v748, 34
        %v866 = vpop.permute.xlu0 %865
        %v867 = vrot.slane %v866, 4
        %v868 = vsel %vm578, %v867, %v866
        %v871 = vmul.bf16 %v863, %v868
        %v872 = vmul.bf16 %v864, %v867
        %875 = vrot.lane.b32.xlu0 %v871, 94
        %v876 = vpop.permute.xlu0 %875
        %877 = vrot.lane.b32.xlu0 %v872, 94
        %v878 = vpop.permute.xlu0 %877
        %v879 = vrot.slane %v876, 4
        %v880 = vrot.slane %v878, 4
        %v881 = vsel %vm348, %v879, %v880
        %v882 = vsel %vm605, %v876, %v881
        %884 = vst [vmem:[#allocation3 + $0x40] sm:$0xff] %v882
        %v885 = vld [vmem:[%s4] sm:$0xf]
        %v886 = vld [vmem:[#allocation3] sm:$0xff]
        %v887 = vld [vmem:[#allocation3 + $0x8] sm:$0xff]
        %v888 = vld [vmem:[#allocation3 + $0x10] sm:$0xff]
        %v889 = vld [vmem:[#allocation3 + $0x18] sm:$0xff]
        %v890 = vld [vmem:[#allocation3 + $0x20] sm:$0xff]
        %v891 = vld [vmem:[#allocation3 + $0x28] sm:$0xff]
        %v892 = vld [vmem:[#allocation3 + $0x30] sm:$0xff]
        %v893 = vld [vmem:[#allocation3 + $0x38] sm:$0xff]
        %v894 = vld [vmem:[#allocation3 + $0x40] sm:$0xff]
        %v895 = vld [vmem:[%s5] sm:$0xff]
        %897 = vset.pattern.permute.xlu0 0
        %898 = vperm.xlu0 %897, %v895
        %v899 = vpop.permute.xlu0 %898
        %v910 = vunpack.c.l.b16 %v886
        %v911 = vunpack.c.h.b16 %v886
        %v912 = vunpack.c.l.b16 %v887
        %v913 = vunpack.c.h.b16 %v887
        %v914 = vunpack.c.l.b16 %v888
        %v915 = vunpack.c.h.b16 %v888
        %v916 = vunpack.c.l.b16 %v889
        %v917 = vunpack.c.h.b16 %v889
        %v918 = vunpack.c.l.b16 %v890
        %v919 = vunpack.c.h.b16 %v890
        %v920 = vunpack.c.l.b16 %v891
        %v921 = vunpack.c.h.b16 %v891
        %v922 = vunpack.c.l.b16 %v892
        %v923 = vunpack.c.h.b16 %v892
        %v924 = vunpack.c.l.b16 %v893
        %v925 = vunpack.c.h.b16 %v893
        %v926 = vunpack.c.l.b16 %v894
        %v927 = vunpack.c.h.b16 %v894
        %v928 = vpack.c.b16 %v912, %v910
        %v929 = vpack.c.b16 %v913, %v911
        %v930 = vpack.c.b16 %v916, %v914
        %v931 = vpack.c.b16 %v917, %v915
        %v932 = vpack.c.b16 %v920, %v918
        %v933 = vpack.c.b16 %v921, %v919
        %v934 = vpack.c.b16 %v924, %v922
        %v935 = vpack.c.b16 %v925, %v923
        %v936 = vpack.c.b16 %v926, %v926
        %v937 = vpack.c.b16 %v927, %v927
        %vm946 = vcmask 588800
        %v948 = vsel %vm946, %v885, 0
        %vm950 = vcmask 1043456
        %v952 = vsel %vm950, %v936, 0
        %v955 = vsel %vm950, %v937, 0
        %957 = vmatprep.subr.bf16.mxu0 0
        %958 = vmatpush1.bf16.msra.mxu0 0
        %959 = vmatprep.subr.bf16.mxu0 0
        %960 = vmatpush1.bf16.msra.mxu0 0
        %961 = vmatprep.subr.bf16.mxu0 0
        %962 = vmatpush1.bf16.msra.mxu0 0
        %963 = vmatprep.subr.bf16.mxu0 %v955
        %964 = vmatpush1.bf16.msra.mxu0 %v952
        %965 = vmatprep.subr.bf16.mxu0 %v935
        %966 = vmatpush1.bf16.msra.mxu0 %v934
        %967 = vmatprep.subr.bf16.mxu0 %v933
        %968 = vmatpush1.bf16.msra.mxu0 %v932
        %969 = vmatprep.subr.bf16.mxu0 %v931
        %970 = vmatpush1.bf16.msra.mxu0 %v930
        %971 = vmatprep.subr.bf16.mxu0 %v929
        %972 = vmatpush1.bf16.msra.mxu0 %v928
        %973 = vmatprep.subr.bf16.mxu0 0
        %974 = vmatpush2.bf16.msra.mxu0 0
        %975 = vmatprep.subr.bf16.mxu0 0
        %976 = vmatpush2.bf16.msra.mxu0 0
        %977 = vmatprep.subr.bf16.mxu0 0
        %978 = vmatpush2.bf16.msra.mxu0 0
        %979 = vmatprep.subr.bf16.mxu0 0
        %980 = vmatpush2.bf16.msra.mxu0 0
        %981 = vmatprep.subr.bf16.mxu0 0
        %982 = vmatpush2.bf16.msra.mxu0 0
        %983 = vmatprep.subr.bf16.mxu0 0
        %984 = vmatpush2.bf16.msra.mxu0 0
        %985 = vmatprep.subr.bf16.mxu0 0
        %986 = vmatpush2.bf16.msra.mxu0 0
        %987 = vmatprep.subr.bf16.mxu0 0
        %988 = vmatpush2.bf16.msra.mxu0 0
        %989 = vmatprep.mubr.bf16.mxu0 0
        %990 = vmatmul.mubr.bf16.gmra.mxu0 %v948
        %v991 = vpop.f32.mrf.mxu0
        %v992 = vadd.f32 %v899, %v991
        %v993 = vpop.f32.mrf.mxu0
        %v994 = vadd.f32 %v899, %v993
        %v995 = vpop.f32.mrf.mxu0
        %v996 = vpop.f32.mrf.mxu0
        %997 = vdwg.mxu0
        %v998 = vmax.f32 %v992, 0.0
        %v999 = vmax.f32 %v994, 0.0
        %1000 = vst [vmem:[%s257] sm:$0xff] %v998
        %1001 = vst [vmem:[%s257 + $0x8] sm:$0xff] %v999
        %s1002 = sand.u32 %s160, 1
        %s1003 = scalar_lea.sflag [#allocation7], %s1002
        %s1004 = sand.u32 %s160, 1
        %s1005 = smul.addr %s1004, 16
        %s1006 = scalar_lea.vmem [#allocation8], %s1005
        // Predicated region
        $region49: #{tpu_custom_call.1} parent=43 // pred_check
          %p1007 = pneg %p170
        $region50: #{tpu_custom_call.1} parent=43 // pred_check_branch
          %1009 = sbr.rel (%p1007) target = $region52
        $region51: #{tpu_custom_call.1} parent=43 // pred_region
          %s1011 = ssub.s32 256, 256
          %1012 = vsyncadd %s1003, %s1011
          %s1013 = smul.addr %s21, 2
          %s1014 = smul.addr %s1013, 128
          %s1015 = scalar_lea.hbm %s6, %s1014
          %s1017 = sshll.u32 %s1006, 4
          %s1018 = int_to_ptr.vmem [resolvable:$true] %s1017
          %1020 = dma.vmem_to_hbm [thread:$0]  %s1018, 256, %s1015, %s1003
        $region52: #{tpu_custom_call.1} parent=43 // pred_fallthru
          _
      $region44: #{tpu_custom_call.1} parent=5 // pred_fallthru
        _
      %p1021 = scmp.le.s32.totalorder 2, %s16
      // Predicated region
      $region53: #{tpu_custom_call.1} parent=5 // pred_check
        %p1022 = pneg %p1021
      $region54: #{tpu_custom_call.1} parent=5 // pred_check_branch
        %1024 = sbr.rel (%p1022) target = $region56
      $region55: #{tpu_custom_call.1} parent=5 // pred_region
        %s1025 = ssub.s32 %s16, 2
        // Predicated region
        $region57: #{tpu_custom_call.1} parent=55 // pred_check
          %p1026 = pneg %p176
        $region58: #{tpu_custom_call.1} parent=55 // pred_check_branch
          %1028 = sbr.rel (%p1026) target = $region60
        $region59: #{tpu_custom_call.1} parent=55 // pred_region
          %s1029 = sand.u32 %s161, 1
          %s1030 = scalar_lea.sflag [#allocation7], %s1029
          %s1031 = sand.u32 %s161, 1
          %s1032 = smul.addr %s1031, 16
          %s1033 = scalar_lea.vmem [#allocation8], %s1032
          %1034 = dma.done %s1030, 256
        $region60: #{tpu_custom_call.1} parent=55 // pred_fallthru
          _
      $region56: #{tpu_custom_call.1} parent=5 // pred_fallthru
        _
    $region6: #{tpu_custom_call.1} parent=1 // loop_footer
      %s20 = sadd.s32 1, %s16
    $region7: #{tpu_custom_call.1} parent=1 // loop_footer_branch
      %15 = sbr.rel target = $region3
    $region8: #{tpu_custom_call.1} parent=1 // loop_exit
      _
    %1035 = vsyncpa [#allocation6], 1
    %s1036 = scalar_lea.sflag [#allocation6], 1
    %1037 = vsyncpa %s1036, 1
    %1038 = vsyncpa [#allocation7], 1
    %s1039 = scalar_lea.sflag [#allocation7], 1
    %1040 = vsyncpa %s1039, 1

</llo_original>
